<compile_context>
chip_gen: v6e
topology: v6e:2x2x1
jax: 0.10.0
libtpu: 0.0.40
codegen_flags: <defaults>
</compile_context>

<pallas_src>
import functools

import jax
import jax.numpy as jnp
from jax.experimental import pallas as pl
from jax.experimental.pallas import tpu as pltpu


HIDDEN = 64


def _round_up(n, m):
    return ((n + m - 1) // m) * m


def critic_kernel(x_ref, a_ref, w1x_ref, w1a_ref, b1_ref,
                  w2_ref, b2_ref, w3_ref, b3_ref, out_ref):
    # fc1: concat([x, a]) @ W1 == x @ W1x + a @ W1a  (split done once at init).
    h1 = (jnp.dot(x_ref[...], w1x_ref[...], preferred_element_type=jnp.float32)
          + jnp.dot(a_ref[...], w1a_ref[...], preferred_element_type=jnp.float32)
          + b1_ref[...])
    h1 = jnp.maximum(h1, 0.0)

    # fc2 + ReLU (cast post-accumulate activations back to the weight dtype so a
    # bf16 parameter set keeps the MXU in its native bf16 input path).
    h2 = jnp.dot(h1.astype(w2_ref.dtype), w2_ref[...],
                 preferred_element_type=jnp.float32) + b2_ref[...]
    h2 = jnp.maximum(h2, 0.0)

    # fc3 as VPU multiply + lane reduction (w3 is a [1, HIDDEN] row vector);
    # avoids a [TB,64]@[64,1] MXU matmul that would use a single MXU column.
    q = jnp.sum(h2 * w3_ref[...], axis=-1, keepdims=True) + b3_ref[...]
    out_ref[...] = q.astype(out_ref.dtype)


@functools.partial(jax.jit, static_argnames=("tb",))
def critic_forward(x, a, params, *, tb=2048):
    """x: [B, state_dim], a: [B, action_dim] -> q: [B, 1] (float32)."""
    w1x, w1a, b1, w2, b2, w3, b3 = params
    B, S = x.shape
    A = a.shape[1]

    # ---- Batch tile selection -------------------------------------------------
    # Per-grid-step fixed cost dominates at these tiny feature dims, so tiles are
    # as big as possible; for large batches keep grid >= 2 so megacore (v7x) can
    # split the "parallel" batch axis across both TensorCores.
    tb = max(8, (tb // 8) * 8)
    if B >= 256:
        target = min(tb, _round_up(pl.cdiv(B, 2), 8))
    else:
        target = tb
    if target >= B:
        TB = B          # single full-batch block; "block == full dim" is always legal
    else:
        TB = target     # multiple of 8; Pallas masks the partial last block
    grid = (pl.cdiv(B, TB),)

    # Weights/biases pinned VMEM-resident across all grid steps.
    pinned = lambda arr: pl.BlockSpec(arr.shape, lambda i: (0,) * arr.ndim)

    out = pl.pallas_call(
        critic_kernel,
        out_shape=jax.ShapeDtypeStruct((B, 1), jnp.float32),
        grid=grid,
        in_specs=[
            pl.BlockSpec((TB, S), lambda i: (i, 0)),   # streamed x tiles
            pl.BlockSpec((TB, A), lambda i: (i, 0)),   # streamed a tiles
            pinned(w1x), pinned(w1a), pinned(b1),
            pinned(w2), pinned(b2),
            pinned(w3), pinned(b3),
        ],
        out_specs=pl.BlockSpec((TB, 1), lambda i: (i, 0)),
        compiler_params=pltpu.CompilerParams(
            dimension_semantics=("parallel",),          # megacore on v7x
            vmem_limit_bytes=32 * 1024 * 1024,          # big tiles OK on v5e too
        ),
    )(x, a, w1x, w1a, b1, w2, b2, w3, b3)
    return out


def init_critic_params(key, state_dim, action_dim, hidden=HIDDEN, dtype=jnp.float32):
    """PyTorch nn.Linear-style init: U(-1/sqrt(fan_in), 1/sqrt(fan_in)).
       Weights stored [in, out]; W1 is pre-split into (W1x, W1a) so the kernel
       needs no concat; fc3 weight stored as a [1, hidden] row vector."""
    def linear(key, fan_in, fan_out):
        kw, kb = jax.random.split(key)
        bound = 1.0 / jnp.sqrt(fan_in)
        w = jax.random.uniform(kw, (fan_in, fan_out), jnp.float32, -bound, bound)
        b = jax.random.uniform(kb, (1, fan_out), jnp.float32, -bound, bound)
        return w, b

    k1, k2, k3 = jax.random.split(key, 3)
    w1, b1 = linear(k1, state_dim + action_dim, hidden)
    w2, b2 = linear(k2, hidden, hidden)
    w3, b3 = linear(k3, hidden, 1)
    w1x, w1a = w1[:state_dim], w1[state_dim:]
    w3 = w3.T            # [1, hidden] row vector for the VPU reduce in fc3
    cast = lambda t: t.astype(dtype)
    return tuple(cast(t) for t in (w1x, w1a, b1, w2, b2, w3, b3))


def critic_reference(x, a, params):
    """Pure-JAX reference for correctness check."""
    w1x, w1a, b1, w2, b2, w3, b3 = params
    f32 = lambda t: t.astype(jnp.float32)
    w1 = jnp.concatenate([f32(w1x), f32(w1a)], axis=0)
    h = jnp.concatenate([x, a], axis=-1)
    h = jax.nn.relu(h @ w1 + f32(b1))
    h = jax.nn.relu(h @ f32(w2) + f32(b2))
    return h @ f32(w3).T + f32(b3)


if __name__ == "__main__":
    key = jax.random.PRNGKey(0)
    k_params, k_x, k_a, k_x2, k_a2 = jax.random.split(key, 5)

    batch, state_dim, action_dim = 8, 16, 4
    params = init_critic_params(k_params, state_dim, action_dim)

    # Small batch: single full-batch block.
    x = jax.random.normal(k_x, (batch, state_dim), jnp.float32)
    a = jax.random.normal(k_a, (batch, action_dim), jnp.float32)
    q = jax.block_until_ready(critic_forward(x, a, params))
    q_ref = critic_reference(x, a, params)
    assert q.shape == (batch, 1)
    assert jnp.allclose(q, q_ref, atol=1e-5, rtol=1e-5), "mismatch vs reference (B=8)"

    # Ragged batch with a small tile: exercises the cdiv grid + partial last block.
    batch2 = 20
    x2 = jax.random.normal(k_x2, (batch2, state_dim), jnp.float32)
    a2 = jax.random.normal(k_a2, (batch2, action_dim), jnp.float32)
    q2 = jax.block_until_ready(critic_forward(x2, a2, params, tb=16))
    q2_ref = critic_reference(x2, a2, params)
    assert q2.shape == (batch2, 1)
    assert jnp.allclose(q2, q2_ref, atol=1e-5, rtol=1e-5), "mismatch vs reference (B=20)"

    print("KERNEL_OK")
</pallas_src>

<mosaic_0001>
module attributes {stable_mosaic.version = 11 : i64} {
  func.func @critic_kernel(%arg0: i32, %arg1: memref<8x16xf32, #tpu.memory_space<vmem>>, %arg2: memref<8x4xf32, #tpu.memory_space<vmem>>, %arg3: memref<16x64xf32, #tpu.memory_space<vmem>>, %arg4: memref<4x64xf32, #tpu.memory_space<vmem>>, %arg5: memref<1x64xf32, #tpu.memory_space<vmem>>, %arg6: memref<64x64xf32, #tpu.memory_space<vmem>>, %arg7: memref<1x64xf32, #tpu.memory_space<vmem>>, %arg8: memref<1x64xf32, #tpu.memory_space<vmem>>, %arg9: memref<1x1xf32, #tpu.memory_space<vmem>>, %arg10: memref<8x1xf32, #tpu.memory_space<vmem>>) attributes {dimension_semantics = [#tpu.dimension_semantics<parallel>], iteration_bounds = array<i64: 1>, scalar_prefetch = 0 : i64, scratch_operands = 0 : i64, tpu.core_type = #tpu.core_type<tc>, window_params = [{transform_indices = @transform_0, window_bounds = array<i64: 8, 16>}, {transform_indices = @transform_1, window_bounds = array<i64: 8, 4>}, {pipeline_mode = #tpu.pipeline_mode<synchronous>, transform_indices = @transform_2, window_bounds = array<i64: 16, 64>}, {pipeline_mode = #tpu.pipeline_mode<synchronous>, transform_indices = @transform_3, window_bounds = array<i64: 4, 64>}, {pipeline_mode = #tpu.pipeline_mode<synchronous>, transform_indices = @transform_4, window_bounds = array<i64: 1, 64>}, {pipeline_mode = #tpu.pipeline_mode<synchronous>, transform_indices = @transform_5, window_bounds = array<i64: 64, 64>}, {pipeline_mode = #tpu.pipeline_mode<synchronous>, transform_indices = @transform_6, window_bounds = array<i64: 1, 64>}, {pipeline_mode = #tpu.pipeline_mode<synchronous>, transform_indices = @transform_7, window_bounds = array<i64: 1, 64>}, {pipeline_mode = #tpu.pipeline_mode<synchronous>, transform_indices = @transform_8, window_bounds = array<i64: 1, 1>}, {transform_indices = @transform_9, window_bounds = array<i64: 8, 1>}]} {
    %c0 = arith.constant 0 : index
    %c0_0 = arith.constant 0 : index
    %0 = vector.load %arg1[%c0, %c0_0] : memref<8x16xf32, #tpu.memory_space<vmem>>, vector<8x16xf32>
    %c0_1 = arith.constant 0 : index
    %c0_2 = arith.constant 0 : index
    %1 = vector.load %arg3[%c0_1, %c0_2] : memref<16x64xf32, #tpu.memory_space<vmem>>, vector<16x64xf32>
    %cst = arith.constant dense<0.000000e+00> : vector<8x64xf32>
    %2 = tpu.matmul %0, %1, %cst {dimension_numbers = #tpu.dot_dimension_numbers<[1], [0], [0], [1], [0, 0, 1, 1], [], []>} : vector<8x16xf32>, vector<16x64xf32>, vector<8x64xf32> -> vector<8x64xf32>
    %c0_3 = arith.constant 0 : index
    %c0_4 = arith.constant 0 : index
    %3 = vector.load %arg2[%c0_3, %c0_4] : memref<8x4xf32, #tpu.memory_space<vmem>>, vector<8x4xf32>
    %c0_5 = arith.constant 0 : index
    %c0_6 = arith.constant 0 : index
    %4 = vector.load %arg4[%c0_5, %c0_6] : memref<4x64xf32, #tpu.memory_space<vmem>>, vector<4x64xf32>
    %cst_7 = arith.constant dense<0.000000e+00> : vector<8x64xf32>
    %5 = tpu.matmul %3, %4, %cst_7 {dimension_numbers = #tpu.dot_dimension_numbers<[1], [0], [0], [1], [0, 0, 1, 1], [], []>} : vector<8x4xf32>, vector<4x64xf32>, vector<8x64xf32> -> vector<8x64xf32>
    %6 = arith.addf %2, %5 : vector<8x64xf32>
    %c0_8 = arith.constant 0 : index
    %c0_9 = arith.constant 0 : index
    %7 = vector.load %arg5[%c0_8, %c0_9] : memref<1x64xf32, #tpu.memory_space<vmem>>, vector<1x64xf32>
    %8 = vector.broadcast %7 : vector<1x64xf32> to vector<8x64xf32>
    %9 = arith.addf %6, %8 : vector<8x64xf32>
    %cst_10 = arith.constant 0.000000e+00 : f32
    %10 = vector.broadcast %cst_10 : f32 to vector<8x64xf32>
    %11 = arith.maximumf %9, %10 : vector<8x64xf32>
    %c0_11 = arith.constant 0 : index
    %c0_12 = arith.constant 0 : index
    %12 = vector.load %arg6[%c0_11, %c0_12] : memref<64x64xf32, #tpu.memory_space<vmem>>, vector<64x64xf32>
    %cst_13 = arith.constant dense<0.000000e+00> : vector<8x64xf32>
    %13 = tpu.matmul %11, %12, %cst_13 {dimension_numbers = #tpu.dot_dimension_numbers<[1], [0], [0], [1], [0, 0, 1, 1], [], []>} : vector<8x64xf32>, vector<64x64xf32>, vector<8x64xf32> -> vector<8x64xf32>
    %c0_14 = arith.constant 0 : index
    %c0_15 = arith.constant 0 : index
    %14 = vector.load %arg7[%c0_14, %c0_15] : memref<1x64xf32, #tpu.memory_space<vmem>>, vector<1x64xf32>
    %15 = vector.broadcast %14 : vector<1x64xf32> to vector<8x64xf32>
    %16 = arith.addf %13, %15 : vector<8x64xf32>
    %cst_16 = arith.constant 0.000000e+00 : f32
    %17 = vector.broadcast %cst_16 : f32 to vector<8x64xf32>
    %18 = arith.maximumf %16, %17 : vector<8x64xf32>
    %c0_17 = arith.constant 0 : index
    %c0_18 = arith.constant 0 : index
    %19 = vector.load %arg8[%c0_17, %c0_18] : memref<1x64xf32, #tpu.memory_space<vmem>>, vector<1x64xf32>
    %20 = vector.broadcast %19 : vector<1x64xf32> to vector<8x64xf32>
    %21 = arith.mulf %18, %20 : vector<8x64xf32>
    %cst_19 = arith.constant dense<0.000000e+00> : vector<8xf32>
    %22 = vector.multi_reduction <add>, %21, %cst_19 [1] : vector<8x64xf32> to vector<8xf32>
    %23 = vector.shape_cast %22 : vector<8xf32> to vector<8x1xf32>
    %c0_20 = arith.constant 0 : index
    %c0_21 = arith.constant 0 : index
    %24 = vector.load %arg9[%c0_20, %c0_21] : memref<1x1xf32, #tpu.memory_space<vmem>>, vector<1x1xf32>
    %25 = vector.broadcast %24 : vector<1x1xf32> to vector<8x1xf32>
    %26 = arith.addf %23, %25 : vector<8x1xf32>
    %c0_22 = arith.constant 0 : index
    %c0_23 = arith.constant 0 : index
    %27 = vector.load %arg10[%c0_22, %c0_23] : memref<8x1xf32, #tpu.memory_space<vmem>>, vector<8x1xf32>
    tpu.vector_store %arg10[%c0_22, %c0_23], %26 {strides = array<i32>} : memref<8x1xf32, #tpu.memory_space<vmem>>, vector<8x1xf32>,
    return
  }
  func.func @transform_0(%arg0: i32) -> (i32, i32) {
    %c0_i32 = arith.constant 0 : i32
    %c0_i32_0 = arith.constant 0 : i32
    return %arg0, %c0_i32 : i32, i32
  }
  func.func @transform_1(%arg0: i32) -> (i32, i32) {
    %c0_i32 = arith.constant 0 : i32
    %c0_i32_0 = arith.constant 0 : i32
    return %arg0, %c0_i32 : i32, i32
  }
  func.func @transform_2(%arg0: i32) -> (i32, i32) {
    %c0_i32 = arith.constant 0 : i32
    %c0_i32_0 = arith.constant 0 : i32
    %c0_i32_1 = arith.constant 0 : i32
    return %c0_i32, %c0_i32_0 : i32, i32
  }
  func.func @transform_3(%arg0: i32) -> (i32, i32) {
    %c0_i32 = arith.constant 0 : i32
    %c0_i32_0 = arith.constant 0 : i32
    %c0_i32_1 = arith.constant 0 : i32
    return %c0_i32, %c0_i32_0 : i32, i32
  }
  func.func @transform_4(%arg0: i32) -> (i32, i32) {
    %c0_i32 = arith.constant 0 : i32
    %c0_i32_0 = arith.constant 0 : i32
    %c0_i32_1 = arith.constant 0 : i32
    return %c0_i32, %c0_i32_0 : i32, i32
  }
  func.func @transform_5(%arg0: i32) -> (i32, i32) {
    %c0_i32 = arith.constant 0 : i32
    %c0_i32_0 = arith.constant 0 : i32
    %c0_i32_1 = arith.constant 0 : i32
    return %c0_i32, %c0_i32_0 : i32, i32
  }
  func.func @transform_6(%arg0: i32) -> (i32, i32) {
    %c0_i32 = arith.constant 0 : i32
    %c0_i32_0 = arith.constant 0 : i32
    %c0_i32_1 = arith.constant 0 : i32
    return %c0_i32, %c0_i32_0 : i32, i32
  }
  func.func @transform_7(%arg0: i32) -> (i32, i32) {
    %c0_i32 = arith.constant 0 : i32
    %c0_i32_0 = arith.constant 0 : i32
    %c0_i32_1 = arith.constant 0 : i32
    return %c0_i32, %c0_i32_0 : i32, i32
  }
  func.func @transform_8(%arg0: i32) -> (i32, i32) {
    %c0_i32 = arith.constant 0 : i32
    %c0_i32_0 = arith.constant 0 : i32
    %c0_i32_1 = arith.constant 0 : i32
    return %c0_i32, %c0_i32_0 : i32, i32
  }
  func.func @transform_9(%arg0: i32) -> (i32, i32) {
    %c0_i32 = arith.constant 0 : i32
    %c0_i32_0 = arith.constant 0 : i32
    return %arg0, %c0_i32 : i32, i32
  }
}

</mosaic_0001>

<llo_original>
// kernel: critic_forward.1
$region0: #{critic_forward.1}
  #allocation0 [shape = 'u32[]', space=smem, size = 0x4, offset = 0x4, fixed_abs, tag = 'smem constant byte address 0x4 - core index']
  #allocation1 [shape = 'u32[144,128]{1,0:T(1,128)}', space=vmem, size = 0x12000, scoped, tag = 'internal scratch']
  #allocation2 [shape = 'f32[1,1]{1,0:T(1,128)S(1)}', space=vmem, size = 0x200, scoped, tag = 'scoped memory for critic_forward.1']
  %s0 = inlined_call_operand.hbm [shape: f32[8,16], index: 0, kind: input, shape index: {}]
  %s1 = inlined_call_operand.vmem [shape: f32[8,4], index: 1, kind: input, shape index: {}]
  %s2 = inlined_call_operand.vmem [shape: f32[16,64], index: 2, kind: input, shape index: {}]
  %s3 = inlined_call_operand.hbm [shape: f32[4,64], index: 3, kind: input, shape index: {}]
  %s4 = inlined_call_operand.vmem [shape: f32[1,64], index: 4, kind: input, shape index: {}]
  %s5 = inlined_call_operand.hbm [shape: f32[64,64], index: 5, kind: input, shape index: {}]
  %s6 = inlined_call_operand.vmem [shape: f32[1,64], index: 6, kind: input, shape index: {}]
  %s7 = inlined_call_operand.vmem [shape: f32[1,64], index: 7, kind: input, shape index: {}]
  %s8 = inlined_call_operand.<no memory space> [shape: f32[1,1], index: 8, kind: input, shape index: {}]
  %s9 = inlined_call_operand.vmem [shape: f32[8,1], index: 9, kind: output, shape index: {}]
  %s10 = sld [smem:[#allocation0]]
  $region58: #{critic_forward.1} parent=0
    _
  %s12 = ssub.s32 1, %s10
  %s13 = scalar_select 0, %s12, %s10
  %v14 = vstv %s8
  %15 = vst [vmem:[#allocation2] sm:$0x1] %v14
  $region1: #{critic_forward.1} parent=0
    #allocation3 [shape = 'u8[4096]{0}', space=vmem, size = 0x1000, scoped, tag = 'input window, operand 0, single buffered']
    #allocation4 [shape = 's32[1]{0}', space=sflag, size = 0x4, scoped, tag = 'scoped memory for critic_forward.1']
    #allocation5 [shape = 'u8[2048]{0}', space=vmem, size = 0x800, scoped, tag = 'input window, operand 3, single buffered']
    #allocation6 [shape = 's32[1]{0}', space=sflag, size = 0x4, scoped, tag = 'scoped memory for critic_forward.1']
    #allocation7 [shape = 'u8[32768]{0}', space=vmem, size = 0x8000, scoped, tag = 'input window, operand 5, single buffered']
    %16 = vsyncpa [#allocation4], 0
    %17 = vsyncpa [#allocation6], 0
    // Predicated region
    $region2: #{critic_forward.1} parent=1 // pred_check
      _
    $region3: #{critic_forward.1} parent=1 // pred_check_branch
      %19 = sbr.rel (0) target = $region5
    $region4: #{critic_forward.1} parent=1 // pred_region
      %s21 = ssub.s32 128, 128
      %22 = vsyncadd [#allocation4], %s21
      %s24 = sshll.u32 [#allocation3], 4
      %s25 = int_to_ptr.vmem [resolvable:$true] %s24
      %27 = dma.hbm_to_vmem [thread:$0]  %s0, 128, %s25, [#allocation4]
    $region5: #{critic_forward.1} parent=1 // pred_fallthru
      _
    // Predicated region
    $region6: #{critic_forward.1} parent=1 // pred_check
      _
    $region7: #{critic_forward.1} parent=1 // pred_check_branch
      %29 = sbr.rel (0) target = $region9
    $region8: #{critic_forward.1} parent=1 // pred_region
      _
    $region9: #{critic_forward.1} parent=1 // pred_fallthru
      _
    // Predicated region
    $region10: #{critic_forward.1} parent=1 // pred_check
      _
    $region11: #{critic_forward.1} parent=1 // pred_check_branch
      %31 = sbr.rel (0) target = $region13
    $region12: #{critic_forward.1} parent=1 // pred_region
      _
    $region13: #{critic_forward.1} parent=1 // pred_fallthru
      _
    // Predicated region
    $region14: #{critic_forward.1} parent=1 // pred_check
      _
    $region15: #{critic_forward.1} parent=1 // pred_check_branch
      %33 = sbr.rel (0) target = $region17
    $region16: #{critic_forward.1} parent=1 // pred_region
      %s35 = ssub.s32 64, 64
      %36 = vsyncadd [#allocation6], %s35
      %s38 = sshll.u32 [#allocation5], 4
      %s39 = int_to_ptr.vmem [resolvable:$true] %s38
      %41 = dma.hbm_to_vmem [thread:$0]  %s3, 64, %s39, [#allocation6]
    $region17: #{critic_forward.1} parent=1 // pred_fallthru
      _
    // Predicated region
    $region18: #{critic_forward.1} parent=1 // pred_check
      _
    $region19: #{critic_forward.1} parent=1 // pred_check_branch
      %43 = sbr.rel (0) target = $region21
    $region20: #{critic_forward.1} parent=1 // pred_region
      _
    $region21: #{critic_forward.1} parent=1 // pred_fallthru
      _
    // Predicated region
    $region22: #{critic_forward.1} parent=1 // pred_check
      _
    $region23: #{critic_forward.1} parent=1 // pred_check_branch
      %45 = sbr.rel (0) target = $region25
    $region24: #{critic_forward.1} parent=1 // pred_region
      %s47 = ssub.s32 1024, 1024
      %48 = vsyncadd [#allocation6], %s47
      %s49 = sshll.u32 [#allocation7], 4
      %s50 = int_to_ptr.vmem [resolvable:$true] %s49
      %55 = dma.hbm_to_vmem [thread:$0]  %s5, 1024, %s50, [#allocation6], 128, 128, 8
    $region25: #{critic_forward.1} parent=1 // pred_fallthru
      _
    // Predicated region
    $region26: #{critic_forward.1} parent=1 // pred_check
      _
    $region27: #{critic_forward.1} parent=1 // pred_check_branch
      %57 = sbr.rel (0) target = $region29
    $region28: #{critic_forward.1} parent=1 // pred_region
      _
    $region29: #{critic_forward.1} parent=1 // pred_fallthru
      _
    // Predicated region
    $region30: #{critic_forward.1} parent=1 // pred_check
      _
    $region31: #{critic_forward.1} parent=1 // pred_check_branch
      %59 = sbr.rel (0) target = $region33
    $region32: #{critic_forward.1} parent=1 // pred_region
      _
    $region33: #{critic_forward.1} parent=1 // pred_fallthru
      _
    // Predicated region
    $region34: #{critic_forward.1} parent=1 // pred_check
      _
    $region35: #{critic_forward.1} parent=1 // pred_check_branch
      %61 = sbr.rel (0) target = $region37
    $region36: #{critic_forward.1} parent=1 // pred_region
      _
    $region37: #{critic_forward.1} parent=1 // pred_fallthru
      _
    // Predicated region
    $region38: #{critic_forward.1} parent=1 // pred_check
      _
    $region39: #{critic_forward.1} parent=1 // pred_check_branch
      %63 = sbr.rel (0) target = $region41
    $region40: #{critic_forward.1} parent=1 // pred_region
      %64 = dma.done [#allocation4], 128
    $region41: #{critic_forward.1} parent=1 // pred_fallthru
      _
    // Predicated region
    $region42: #{critic_forward.1} parent=1 // pred_check
      _
    $region43: #{critic_forward.1} parent=1 // pred_check_branch
      %66 = sbr.rel (0) target = $region45
    $region44: #{critic_forward.1} parent=1 // pred_region
      %67 = dma.done [#allocation6], 64
    $region45: #{critic_forward.1} parent=1 // pred_fallthru
      _
    // Predicated region
    $region46: #{critic_forward.1} parent=1 // pred_check
      _
    $region47: #{critic_forward.1} parent=1 // pred_check_branch
      %69 = sbr.rel (0) target = $region49
    $region48: #{critic_forward.1} parent=1 // pred_region
      %70 = dma.done [#allocation6], 1024
    $region49: #{critic_forward.1} parent=1 // pred_fallthru
      _
    %v71 = vld [vmem:[#allocation3] sm:$0xff]
    %v72 = vld [vmem:[%s2] sm:$0xff]
    %v73 = vld [vmem:[%s2 + $0x8] sm:$0xff]
    %v74 = vld [vmem:[%s1] sm:$0xff]
    %v75 = vld [vmem:[#allocation5] sm:$0xf]
    %vm76 = vcmask 31744
    %v78 = vsel %vm76, %v74, 0
    %vm80 = vcmask 1043456
    %v82 = vsel %vm80, %v75, 0
    %84 = vmatprep.subr.mxu0 0.0
    %85 = vmatpush1.msra.mxu0 0.0
    %86 = vmatprep.subr.mxu0 0.0
    %87 = vmatpush1.msra.mxu0 0.0
    %88 = vmatprep.subr.mxu0 0.0
    %89 = vmatpush1.msra.mxu0 0.0
    %90 = vmatprep.subr.mxu0 0.0
    %91 = vmatpush1.msra.mxu0 0.0
    %92 = vmatprep.subr.mxu0 0.0
    %93 = vmatpush1.msra.mxu0 0.0
    %94 = vmatprep.subr.mxu0 0.0
    %95 = vmatpush1.msra.mxu0 0.0
    %96 = vmatprep.subr.mxu0 0.0
    %97 = vmatpush1.msra.mxu0 0.0
    %98 = vmatprep.subr.mxu0 0.0
    %99 = vmatpush1.msra.mxu0 0.0
    %100 = vmatprep.subr.mxu0 0.0
    %101 = vmatpush1.msra.mxu0 0.0
    %102 = vmatprep.subr.mxu0 0.0
    %103 = vmatpush1.msra.mxu0 0.0
    %104 = vmatprep.subr.mxu0 0.0
    %105 = vmatpush1.msra.mxu0 0.0
    %106 = vmatprep.subr.mxu0 0.0
    %107 = vmatpush1.msra.mxu0 0.0
    %108 = vmatprep.subr.mxu0 0.0
    %109 = vmatpush1.msra.mxu0 0.0
    %110 = vmatprep.subr.mxu0 0.0
    %111 = vmatpush1.msra.mxu0 0.0
    %112 = vmatprep.subr.mxu0 0.0
    %113 = vmatpush1.msra.mxu0 0.0
    %114 = vmatprep.subr.mxu0 0.0
    %115 = vmatpush1.msra.mxu0 %v82
    %116 = vmatprep.subr.mxu0 0.0
    %117 = vmatpush2.msra.mxu0 0.0
    %118 = vmatprep.subr.mxu0 0.0
    %119 = vmatpush2.msra.mxu0 0.0
    %120 = vmatprep.subr.mxu0 0.0
    %121 = vmatpush2.msra.mxu0 0.0
    %122 = vmatprep.subr.mxu0 0.0
    %123 = vmatpush2.msra.mxu0 0.0
    %124 = vmatprep.subr.mxu0 0.0
    %125 = vmatpush2.msra.mxu0 0.0
    %126 = vmatprep.subr.mxu0 0.0
    %127 = vmatpush2.msra.mxu0 0.0
    %128 = vmatprep.subr.mxu0 0.0
    %129 = vmatpush2.msra.mxu0 0.0
    %130 = vmatprep.subr.mxu0 0.0
    %131 = vmatpush2.msra.mxu0 0.0
    %132 = vmatprep.subr.mxu0 0.0
    %133 = vmatpush2.msra.mxu0 0.0
    %134 = vmatprep.subr.mxu0 0.0
    %135 = vmatpush2.msra.mxu0 0.0
    %136 = vmatprep.subr.mxu0 0.0
    %137 = vmatpush2.msra.mxu0 0.0
    %138 = vmatprep.subr.mxu0 0.0
    %139 = vmatpush2.msra.mxu0 0.0
    %140 = vmatprep.subr.mxu0 0.0
    %141 = vmatpush2.msra.mxu0 0.0
    %142 = vmatprep.subr.mxu0 0.0
    %143 = vmatpush2.msra.mxu0 0.0
    %144 = vmatprep.subr.mxu0 0.0
    %145 = vmatpush2.msra.mxu0 0.0
    %146 = vmatprep.subr.mxu0 0.0
    %147 = vmatpush2.msra.mxu0 0.0
    %148 = vmatprep.mubr.f32.mxu0 0.0
    %149 = vmatmul.mubr.f32.gmra.mxu0 %v78
    %v150 = vpop.f32.mrf.mxu0
    %v151 = vadd.f32 0.0, %v150
    %v152 = vpop.f32.mrf.mxu0
    %153 = vdwg.mxu0
    %vm154 = vcmask 130048
    %v156 = vsel %vm154, %v71, 0
    %158 = vmatprep.subr.mxu0 0.0
    %159 = vmatpush1.msra.mxu0 0.0
    %160 = vmatprep.subr.mxu0 0.0
    %161 = vmatpush1.msra.mxu0 0.0
    %162 = vmatprep.subr.mxu0 0.0
    %163 = vmatpush1.msra.mxu0 0.0
    %164 = vmatprep.subr.mxu0 0.0
    %165 = vmatpush1.msra.mxu0 0.0
    %166 = vmatprep.subr.mxu0 0.0
    %167 = vmatpush1.msra.mxu0 0.0
    %168 = vmatprep.subr.mxu0 0.0
    %169 = vmatpush1.msra.mxu0 0.0
    %170 = vmatprep.subr.mxu0 0.0
    %171 = vmatpush1.msra.mxu0 0.0
    %172 = vmatprep.subr.mxu0 0.0
    %173 = vmatpush1.msra.mxu0 0.0
    %174 = vmatprep.subr.mxu0 0.0
    %175 = vmatpush1.msra.mxu0 0.0
    %176 = vmatprep.subr.mxu0 0.0
    %177 = vmatpush1.msra.mxu0 0.0
    %178 = vmatprep.subr.mxu0 0.0
    %179 = vmatpush1.msra.mxu0 0.0
    %180 = vmatprep.subr.mxu0 0.0
    %181 = vmatpush1.msra.mxu0 0.0
    %182 = vmatprep.subr.mxu0 0.0
    %183 = vmatpush1.msra.mxu0 0.0
    %184 = vmatprep.subr.mxu0 0.0
    %185 = vmatpush1.msra.mxu0 0.0
    %186 = vmatprep.subr.mxu0 0.0
    %187 = vmatpush1.msra.mxu0 %v73
    %188 = vmatprep.subr.mxu0 0.0
    %189 = vmatpush1.msra.mxu0 %v72
    %190 = vmatprep.subr.mxu0 0.0
    %191 = vmatpush2.msra.mxu0 0.0
    %192 = vmatprep.subr.mxu0 0.0
    %193 = vmatpush2.msra.mxu0 0.0
    %194 = vmatprep.subr.mxu0 0.0
    %195 = vmatpush2.msra.mxu0 0.0
    %196 = vmatprep.subr.mxu0 0.0
    %197 = vmatpush2.msra.mxu0 0.0
    %198 = vmatprep.subr.mxu0 0.0
    %199 = vmatpush2.msra.mxu0 0.0
    %200 = vmatprep.subr.mxu0 0.0
    %201 = vmatpush2.msra.mxu0 0.0
    %202 = vmatprep.subr.mxu0 0.0
    %203 = vmatpush2.msra.mxu0 0.0
    %204 = vmatprep.subr.mxu0 0.0
    %205 = vmatpush2.msra.mxu0 0.0
    %206 = vmatprep.subr.mxu0 0.0
    %207 = vmatpush2.msra.mxu0 0.0
    %208 = vmatprep.subr.mxu0 0.0
    %209 = vmatpush2.msra.mxu0 0.0
    %210 = vmatprep.subr.mxu0 0.0
    %211 = vmatpush2.msra.mxu0 0.0
    %212 = vmatprep.subr.mxu0 0.0
    %213 = vmatpush2.msra.mxu0 0.0
    %214 = vmatprep.subr.mxu0 0.0
    %215 = vmatpush2.msra.mxu0 0.0
    %216 = vmatprep.subr.mxu0 0.0
    %217 = vmatpush2.msra.mxu0 0.0
    %218 = vmatprep.subr.mxu0 0.0
    %219 = vmatpush2.msra.mxu0 0.0
    %220 = vmatprep.subr.mxu0 0.0
    %221 = vmatpush2.msra.mxu0 0.0
    %222 = vmatprep.mubr.f32.mxu0 0.0
    %223 = vmatmul.mubr.f32.gmra.mxu0 %v156
    %v224 = vpop.f32.mrf.mxu0
    %v225 = vadd.f32 %v151, %v224
    %v226 = vpop.f32.mrf.mxu0
    %227 = vdwg.mxu0
    %v228 = vld [vmem:[%s4] sm:$0x1]
    %v230 = vlaneseq
    %v231 = vshrl.u32 %v230, 7
    %v232 = vsub.s32 0, %v231
    %v233 = vrot.slane %v228, %v232
    %v235 = vadd.f32 %v225, %v233
    %v236 = vmax.f32 %v235, 0.0
    %v237 = vld [vmem:[#allocation7] sm:$0xff]
    %v238 = vld [vmem:[#allocation7 + $0x8] sm:$0xff]
    %v239 = vld [vmem:[#allocation7 + $0x10] sm:$0xff]
    %v240 = vld [vmem:[#allocation7 + $0x18] sm:$0xff]
    %v241 = vld [vmem:[#allocation7 + $0x20] sm:$0xff]
    %v242 = vld [vmem:[#allocation7 + $0x28] sm:$0xff]
    %v243 = vld [vmem:[#allocation7 + $0x30] sm:$0xff]
    %v244 = vld [vmem:[#allocation7 + $0x38] sm:$0xff]
    %v245 = vld [vmem:[%s6] sm:$0x1]
    %v247 = vlaneseq
    %v248 = vshrl.u32 %v247, 7
    %v249 = vsub.s32 0, %v248
    %v250 = vrot.slane %v245, %v249
    %vm252 = vcmask 523264
    %v254 = vsel %vm252, %v236, 0
    %256 = vmatprep.subr.mxu0 0.0
    %257 = vmatpush1.msra.mxu0 0.0
    %258 = vmatprep.subr.mxu0 0.0
    %259 = vmatpush1.msra.mxu0 0.0
    %260 = vmatprep.subr.mxu0 0.0
    %261 = vmatpush1.msra.mxu0 0.0
    %262 = vmatprep.subr.mxu0 0.0
    %263 = vmatpush1.msra.mxu0 0.0
    %264 = vmatprep.subr.mxu0 0.0
    %265 = vmatpush1.msra.mxu0 0.0
    %266 = vmatprep.subr.mxu0 0.0
    %267 = vmatpush1.msra.mxu0 0.0
    %268 = vmatprep.subr.mxu0 0.0
    %269 = vmatpush1.msra.mxu0 0.0
    %270 = vmatprep.subr.mxu0 0.0
    %271 = vmatpush1.msra.mxu0 0.0
    %272 = vmatprep.subr.mxu0 0.0
    %273 = vmatpush1.msra.mxu0 %v244
    %274 = vmatprep.subr.mxu0 0.0
    %275 = vmatpush1.msra.mxu0 %v243
    %276 = vmatprep.subr.mxu0 0.0
    %277 = vmatpush1.msra.mxu0 %v242
    %278 = vmatprep.subr.mxu0 0.0
    %279 = vmatpush1.msra.mxu0 %v241
    %280 = vmatprep.subr.mxu0 0.0
    %281 = vmatpush1.msra.mxu0 %v240
    %282 = vmatprep.subr.mxu0 0.0
    %283 = vmatpush1.msra.mxu0 %v239
    %284 = vmatprep.subr.mxu0 0.0
    %285 = vmatpush1.msra.mxu0 %v238
    %286 = vmatprep.subr.mxu0 0.0
    %287 = vmatpush1.msra.mxu0 %v237
    %288 = vmatprep.subr.mxu0 0.0
    %289 = vmatpush2.msra.mxu0 0.0
    %290 = vmatprep.subr.mxu0 0.0
    %291 = vmatpush2.msra.mxu0 0.0
    %292 = vmatprep.subr.mxu0 0.0
    %293 = vmatpush2.msra.mxu0 0.0
    %294 = vmatprep.subr.mxu0 0.0
    %295 = vmatpush2.msra.mxu0 0.0
    %296 = vmatprep.subr.mxu0 0.0
    %297 = vmatpush2.msra.mxu0 0.0
    %298 = vmatprep.subr.mxu0 0.0
    %299 = vmatpush2.msra.mxu0 0.0
    %300 = vmatprep.subr.mxu0 0.0
    %301 = vmatpush2.msra.mxu0 0.0
    %302 = vmatprep.subr.mxu0 0.0
    %303 = vmatpush2.msra.mxu0 0.0
    %304 = vmatprep.subr.mxu0 0.0
    %305 = vmatpush2.msra.mxu0 0.0
    %306 = vmatprep.subr.mxu0 0.0
    %307 = vmatpush2.msra.mxu0 0.0
    %308 = vmatprep.subr.mxu0 0.0
    %309 = vmatpush2.msra.mxu0 0.0
    %310 = vmatprep.subr.mxu0 0.0
    %311 = vmatpush2.msra.mxu0 0.0
    %312 = vmatprep.subr.mxu0 0.0
    %313 = vmatpush2.msra.mxu0 0.0
    %314 = vmatprep.subr.mxu0 0.0
    %315 = vmatpush2.msra.mxu0 0.0
    %316 = vmatprep.subr.mxu0 0.0
    %317 = vmatpush2.msra.mxu0 0.0
    %318 = vmatprep.subr.mxu0 0.0
    %319 = vmatpush2.msra.mxu0 0.0
    %320 = vmatprep.mubr.f32.mxu0 0.0
    %321 = vmatmul.mubr.f32.gmra.mxu0 %v254
    %v322 = vpop.f32.mrf.mxu0
    %v323 = vadd.f32 %v250, %v322
    %v324 = vpop.f32.mrf.mxu0
    %325 = vdwg.mxu0
    %v326 = vmax.f32 %v323, 0.0
    %v327 = vld [vmem:[%s7] sm:$0x1]
    %v329 = vlaneseq
    %v330 = vshrl.u32 %v329, 7
    %v331 = vsub.s32 0, %v330
    %v332 = vrot.slane %v327, %v331
    %v334 = vmul.f32 %v326, %v332
    %v335 = vsel %vm252, %v334, 0.0
    %336 = vadd.xlane.f32.xlu0 %v335
    %v337 = vpop.xlane.xlu0 %336
    %v338 = vld [vmem:[#allocation2] sm:$0x1]
    %v340 = vlaneseq
    %v341 = vshrl.u32 %v340, 7
    %v342 = vsub.s32 0, %v341
    %v343 = vrot.slane %v338, %v342
    %v345 = vadd.f32 %v337, %v343
    %vm346 = vcmask 7168
    %347 = vst.msk [vmem:[%s9] sm:$0xff] %vm346, %v345
    // Predicated region
    $region50: #{critic_forward.1} parent=1 // pred_check
      _
    $region51: #{critic_forward.1} parent=1 // pred_check_branch
      %349 = sbr.rel (0) target = $region53
    $region52: #{critic_forward.1} parent=1 // pred_region
      _
    $region53: #{critic_forward.1} parent=1 // pred_fallthru
      _
    // Predicated region
    $region54: #{critic_forward.1} parent=1 // pred_check
      _
    $region55: #{critic_forward.1} parent=1 // pred_check_branch
      %351 = sbr.rel (0) target = $region57
    $region56: #{critic_forward.1} parent=1 // pred_region
      _
    $region57: #{critic_forward.1} parent=1 // pred_fallthru
      _
    %352 = vsyncpa [#allocation4], 1
    %353 = vsyncpa [#allocation6], 1

</llo_original>
